<compile_context>
chip_gen: v6e
topology: v6e:2x2x1
jax: 0.10.0
libtpu: 0.0.40
codegen_flags: <defaults>
</compile_context>

<pallas_src>
import jax
import jax.numpy as jnp
from jax import lax
from jax.experimental import pallas as pl
from jax.experimental.pallas import tpu as pltpu


# ----------------------------------------------------------------------------
# Pallas kernel: full forward after the embedding lookup (one batch tile).
#   shared bottom MLP:  (TB, D) -> (TB, 64) -> (TB, 32)   (Linear + ReLU each)
#   fused towers     :  (TB, 32) -> (TB, 2*16) -> (TB, 2) via block-diag W
#   prediction       :  sigmoid on column 0 (classification), identity on col 1
# ----------------------------------------------------------------------------
def shared_bottom_kernel(
    x_ref,                                   # (TB, D)  bf16 concatenated embeddings
    bw1_ref, bb1_ref, bw2_ref, bb2_ref,      # shared bottom MLP params (W bf16, b f32)
    tw1_ref, tb1_ref, tw2_ref, tb2_ref,      # fused tower params (W bf16, b f32)
    out_ref,                                 # (TB, num_tasks) f32
):
    x = x_ref[...]

    # ---- shared bottom MLP (Linear + ReLU per layer), f32 accumulate ----
    h = jnp.dot(x, bw1_ref[...], preferred_element_type=jnp.float32) + bb1_ref[...]
    h = jnp.maximum(h, 0.0)
    h = jnp.dot(h.astype(jnp.bfloat16), bw2_ref[...],
                preferred_element_type=jnp.float32) + bb2_ref[...]
    h = jnp.maximum(h, 0.0)

    # ---- fused towers: one matmul for both tower hidden layers ----
    t = jnp.dot(h.astype(jnp.bfloat16), tw1_ref[...],
                preferred_element_type=jnp.float32) + tb1_ref[...]
    t = jnp.maximum(t, 0.0)

    # ---- block-diagonal output matmul -> (TB, 2) directly ----
    y = jnp.dot(t.astype(jnp.bfloat16), tw2_ref[...],
                preferred_element_type=jnp.float32) + tb2_ref[...]

    # prediction layers: sigmoid on task 0 (classification), identity on task 1
    col = lax.broadcasted_iota(jnp.int32, y.shape, 1)
    out_ref[...] = jnp.where(col == 0, jax.nn.sigmoid(y), y)


# ----------------------------------------------------------------------------
# Host-side parameter fusion / casting for the kernel
# ----------------------------------------------------------------------------
def prepare_kernel_params(p):
    """Fuse the two towers and pre-cast matmul weights to bf16 (biases stay f32)."""
    kp = {
        "bw1": p["bw1"].astype(jnp.bfloat16), "bb1": p["bb1"],
        "bw2": p["bw2"].astype(jnp.bfloat16), "bb2": p["bb2"],
    }
    # tower hidden layers side-by-side: (H2, 2*T)
    tw1 = jnp.concatenate([p["t0w1"], p["t1w1"]], axis=1)
    tb1 = jnp.concatenate([p["t0b1"], p["t1b1"]], axis=1)
    # block-diagonal output weight: (2*T, 2)
    T = p["t0w1"].shape[1]
    z = jnp.zeros((T, 1), jnp.float32)
    tw2 = jnp.concatenate(
        [jnp.concatenate([p["t0w2"], z], axis=1),
         jnp.concatenate([z, p["t1w2"]], axis=1)], axis=0)
    tb2 = jnp.concatenate([p["t0b2"], p["t1b2"]], axis=1)
    kp["tw1"] = tw1.astype(jnp.bfloat16)
    kp["tb1"] = tb1
    kp["tw2"] = tw2.astype(jnp.bfloat16)
    kp["tb2"] = tb2
    return kp


def shared_bottom_forward(x_emb, kp, tile_b=1024):
    """Run the fused, batch-tiled Pallas kernel. x_emb: (B, D) float32."""
    B, D = x_emb.shape
    num_tasks = kp["tw2"].shape[1]

    x = x_emb.astype(jnp.bfloat16)

    # Batch tile: big enough to amortize per-step overhead (~0.35 us/step),
    # small enough for v5e's 16 MiB / v7x's 32 MiB default scoped VMEM
    # (weights here are ~10 KiB total; a 1024-row bf16 x tile is 64 KiB).
    tb = min(tile_b, B)
    if tb < B:
        tb = max(16, (tb // 16) * 16)     # keep sublane tiles aligned for bf16
    pad = (-B) % tb
    if pad:
        x = jnp.pad(x, ((0, pad), (0, 0)))
    Bp = B + pad
    grid = (Bp // tb,)

    w_args = (kp["bw1"], kp["bb1"], kp["bw2"], kp["bb2"],
              kp["tw1"], kp["tb1"], kp["tw2"], kp["tb2"])

    # weights/biases: full-array blocks, constant index_map -> VMEM-resident
    def wspec(a):
        return pl.BlockSpec(a.shape, lambda i: (0, 0))

    h1 = kp["bw1"].shape[1]
    h2 = kp["bw2"].shape[1]
    th = kp["tw1"].shape[1]
    flops = 2 * Bp * (D * h1 + h1 * h2 + h2 * th + th * num_tasks)
    bytes_accessed = (x.size * 2 + Bp * num_tasks * 4
                      + sum(int(a.size) * a.dtype.itemsize for a in w_args))

    out = pl.pallas_call(
        shared_bottom_kernel,
        out_shape=jax.ShapeDtypeStruct((Bp, num_tasks), jnp.float32),
        grid=grid,
        in_specs=[pl.BlockSpec((tb, D), lambda i: (i, 0))]
                 + [wspec(a) for a in w_args],
        out_specs=pl.BlockSpec((tb, num_tasks), lambda i: (i, 0)),
        compiler_params=pltpu.CompilerParams(
            dimension_semantics=("parallel",)),   # megacore sharding on v7x
        cost_estimate=pl.CostEstimate(
            flops=flops, transcendentals=Bp, bytes_accessed=bytes_accessed),
    )(x, *w_args)

    return out[:B]


# ----------------------------------------------------------------------------
# Parameter / embedding setup (plain JAX glue)
# ----------------------------------------------------------------------------
def init_params(key, bottom_dims, bottom_mlp_dims, tower_dims):
    """Deterministic init. Weights stored as (in_dim, out_dim)."""
    def dense(k, din, dout):
        kw, kb = jax.random.split(k)
        scale = 1.0 / jnp.sqrt(jnp.float32(din))
        w = jax.random.uniform(kw, (din, dout), jnp.float32, -scale, scale)
        b = jax.random.uniform(kb, (1, dout), jnp.float32, -scale, scale)
        return w, b

    keys = jax.random.split(key, 8)
    p = {}
    # shared bottom MLP: bottom_dims -> bottom_mlp_dims[0] -> bottom_mlp_dims[1]
    p["bw1"], p["bb1"] = dense(keys[0], bottom_dims, bottom_mlp_dims[0])
    p["bw2"], p["bb2"] = dense(keys[1], bottom_mlp_dims[0], bottom_mlp_dims[1])
    # tower 0: bottom_mlp_dims[-1] -> tower_dims[0] -> 1 (output layer)
    p["t0w1"], p["t0b1"] = dense(keys[2], bottom_mlp_dims[1], tower_dims[0])
    p["t0w2"], p["t0b2"] = dense(keys[3], tower_dims[0], 1)
    # tower 1
    p["t1w1"], p["t1b1"] = dense(keys[4], bottom_mlp_dims[1], tower_dims[0])
    p["t1w2"], p["t1b2"] = dense(keys[5], tower_dims[0], 1)
    return p


def embedding_lookup(x_ids, tables):
    """EmbeddingLayer(..., squeeze_dim=True): per-feature lookup then concat.
    x_ids: (B, num_features) int32; tables: list of (vocab, embed_dim)."""
    # TODO(synk): optionally fuse this gather into the kernel (tables are ~6 KB,
    # fit trivially in VMEM) to avoid materializing x_emb in HBM between the
    # XLA gather and the pallas_call.
    embs = [jnp.take(tables[f], x_ids[:, f], axis=0) for f in range(len(tables))]
    return jnp.concatenate(embs, axis=1)  # (B, sum(embed_dim))


def reference_forward(x_emb, p):
    """Pure-JAX f32 reference (same math, no Pallas) for a correctness check."""
    h = jnp.maximum(x_emb @ p["bw1"] + p["bb1"], 0.0)
    h = jnp.maximum(h @ p["bw2"] + p["bb2"], 0.0)
    t0 = jnp.maximum(h @ p["t0w1"] + p["t0b1"], 0.0)
    y0 = jax.nn.sigmoid(t0 @ p["t0w2"] + p["t0b2"])
    t1 = jnp.maximum(h @ p["t1w1"] + p["t1b1"], 0.0)
    y1 = t1 @ p["t1w2"] + p["t1b2"]
    return jnp.concatenate([y0, y1], axis=1)


if __name__ == "__main__":
    key = jax.random.PRNGKey(0)

    # Synthetic feature config: 4 sparse features, embed_dim=8 each -> bottom_dims=32
    num_features, vocab_size, embed_dim = 4, 50, 8
    bottom_dims = num_features * embed_dim
    bottom_mlp_dims = [64, 32]          # bottom_params["dims"]
    tower_dims = [16]                   # tower_params_list[i]["dims"]
    task_types = ["classification", "regression"]

    k_ids, k_emb, k_par = jax.random.split(key, 3)

    # embedding tables (one per feature)
    emb_keys = jax.random.split(k_emb, num_features)
    tables = [
        jax.random.normal(emb_keys[f], (vocab_size, embed_dim), jnp.float32) * 0.1
        for f in range(num_features)
    ]

    params = init_params(k_par, bottom_dims, bottom_mlp_dims, tower_dims)
    kparams = prepare_kernel_params(params)

    # ---- check 1: small batch, single tile ----
    B = 8
    x_ids = jax.random.randint(k_ids, (B, num_features), 0, vocab_size, dtype=jnp.int32)
    x_emb = embedding_lookup(x_ids, tables)          # embedding glue, plain JAX
    out = shared_bottom_forward(x_emb, kparams)       # fused Pallas MLP/tower kernel
    out = jax.block_until_ready(out)
    ref = reference_forward(x_emb, params)
    assert out.shape == (B, len(task_types))
    # bf16 matmul operands -> loosened tolerance vs f32 reference
    assert jnp.allclose(out, ref, atol=2e-2, rtol=2e-2), "mismatch vs reference (B=8)"

    # ---- check 2: exercise the multi-tile + padding path ----
    B2 = 40
    x_ids2 = jax.random.randint(jax.random.PRNGKey(7), (B2, num_features),
                                0, vocab_size, dtype=jnp.int32)
    x_emb2 = embedding_lookup(x_ids2, tables)
    out2 = shared_bottom_forward(x_emb2, kparams, tile_b=16)   # 3 grid steps, 8 pad rows
    out2 = jax.block_until_ready(out2)
    ref2 = reference_forward(x_emb2, params)
    assert out2.shape == (B2, len(task_types))
    assert jnp.allclose(out2, ref2, atol=2e-2, rtol=2e-2), "mismatch vs reference (B=40)"

    print("KERNEL_OK")
</pallas_src>

<mosaic_0001>
module attributes {stable_mosaic.version = 11 : i64} {
  func.func @shared_bottom_kernel(%arg0: i32, %arg1: memref<8x32xbf16, #tpu.memory_space<vmem>>, %arg2: memref<32x64xbf16, #tpu.memory_space<vmem>>, %arg3: memref<1x64xf32, #tpu.memory_space<vmem>>, %arg4: memref<64x32xbf16, #tpu.memory_space<vmem>>, %arg5: memref<1x32xf32, #tpu.memory_space<vmem>>, %arg6: memref<32x32xbf16, #tpu.memory_space<vmem>>, %arg7: memref<1x32xf32, #tpu.memory_space<vmem>>, %arg8: memref<32x2xbf16, #tpu.memory_space<vmem>>, %arg9: memref<1x2xf32, #tpu.memory_space<vmem>>, %arg10: memref<8x2xf32, #tpu.memory_space<vmem>>) attributes {dimension_semantics = [#tpu.dimension_semantics<parallel>], iteration_bounds = array<i64: 1>, scalar_prefetch = 0 : i64, scratch_operands = 0 : i64, tpu.core_type = #tpu.core_type<tc>, window_params = [{transform_indices = @transform_0, window_bounds = array<i64: 8, 32>}, {pipeline_mode = #tpu.pipeline_mode<synchronous>, transform_indices = @transform_1, window_bounds = array<i64: 32, 64>}, {pipeline_mode = #tpu.pipeline_mode<synchronous>, transform_indices = @transform_2, window_bounds = array<i64: 1, 64>}, {pipeline_mode = #tpu.pipeline_mode<synchronous>, transform_indices = @transform_3, window_bounds = array<i64: 64, 32>}, {pipeline_mode = #tpu.pipeline_mode<synchronous>, transform_indices = @transform_4, window_bounds = array<i64: 1, 32>}, {pipeline_mode = #tpu.pipeline_mode<synchronous>, transform_indices = @transform_5, window_bounds = array<i64: 32, 32>}, {pipeline_mode = #tpu.pipeline_mode<synchronous>, transform_indices = @transform_6, window_bounds = array<i64: 1, 32>}, {pipeline_mode = #tpu.pipeline_mode<synchronous>, transform_indices = @transform_7, window_bounds = array<i64: 32, 2>}, {pipeline_mode = #tpu.pipeline_mode<synchronous>, transform_indices = @transform_8, window_bounds = array<i64: 1, 2>}, {transform_indices = @transform_9, window_bounds = array<i64: 8, 2>}]} {
    %c0 = arith.constant 0 : index
    %c0_0 = arith.constant 0 : index
    %0 = vector.load %arg1[%c0, %c0_0] : memref<8x32xbf16, #tpu.memory_space<vmem>>, vector<8x32xbf16>
    %c0_1 = arith.constant 0 : index
    %c0_2 = arith.constant 0 : index
    %1 = vector.load %arg2[%c0_1, %c0_2] : memref<32x64xbf16, #tpu.memory_space<vmem>>, vector<32x64xbf16>
    %cst = arith.constant dense<0.000000e+00> : vector<8x64xf32>
    %2 = tpu.matmul %0, %1, %cst {dimension_numbers = #tpu.dot_dimension_numbers<[1], [0], [0], [1], [0, 0, 1, 1], [], []>} : vector<8x32xbf16>, vector<32x64xbf16>, vector<8x64xf32> -> vector<8x64xf32>
    %c0_3 = arith.constant 0 : index
    %c0_4 = arith.constant 0 : index
    %3 = vector.load %arg3[%c0_3, %c0_4] : memref<1x64xf32, #tpu.memory_space<vmem>>, vector<1x64xf32>
    %4 = vector.broadcast %3 : vector<1x64xf32> to vector<8x64xf32>
    %5 = arith.addf %2, %4 : vector<8x64xf32>
    %cst_5 = arith.constant 0.000000e+00 : f32
    %6 = vector.broadcast %cst_5 : f32 to vector<8x64xf32>
    %7 = arith.maximumf %5, %6 : vector<8x64xf32>
    %8 = arith.truncf %7 : vector<8x64xf32> to vector<8x64xbf16>
    %c0_6 = arith.constant 0 : index
    %c0_7 = arith.constant 0 : index
    %9 = vector.load %arg4[%c0_6, %c0_7] : memref<64x32xbf16, #tpu.memory_space<vmem>>, vector<64x32xbf16>
    %cst_8 = arith.constant dense<0.000000e+00> : vector<8x32xf32>
    %10 = tpu.matmul %8, %9, %cst_8 {dimension_numbers = #tpu.dot_dimension_numbers<[1], [0], [0], [1], [0, 0, 1, 1], [], []>} : vector<8x64xbf16>, vector<64x32xbf16>, vector<8x32xf32> -> vector<8x32xf32>
    %c0_9 = arith.constant 0 : index
    %c0_10 = arith.constant 0 : index
    %11 = vector.load %arg5[%c0_9, %c0_10] : memref<1x32xf32, #tpu.memory_space<vmem>>, vector<1x32xf32>
    %12 = vector.broadcast %11 : vector<1x32xf32> to vector<8x32xf32>
    %13 = arith.addf %10, %12 : vector<8x32xf32>
    %cst_11 = arith.constant 0.000000e+00 : f32
    %14 = vector.broadcast %cst_11 : f32 to vector<8x32xf32>
    %15 = arith.maximumf %13, %14 : vector<8x32xf32>
    %16 = arith.truncf %15 : vector<8x32xf32> to vector<8x32xbf16>
    %c0_12 = arith.constant 0 : index
    %c0_13 = arith.constant 0 : index
    %17 = vector.load %arg6[%c0_12, %c0_13] : memref<32x32xbf16, #tpu.memory_space<vmem>>, vector<32x32xbf16>
    %cst_14 = arith.constant dense<0.000000e+00> : vector<8x32xf32>
    %18 = tpu.matmul %16, %17, %cst_14 {dimension_numbers = #tpu.dot_dimension_numbers<[1], [0], [0], [1], [0, 0, 1, 1], [], []>} : vector<8x32xbf16>, vector<32x32xbf16>, vector<8x32xf32> -> vector<8x32xf32>
    %c0_15 = arith.constant 0 : index
    %c0_16 = arith.constant 0 : index
    %19 = vector.load %arg7[%c0_15, %c0_16] : memref<1x32xf32, #tpu.memory_space<vmem>>, vector<1x32xf32>
    %20 = vector.broadcast %19 : vector<1x32xf32> to vector<8x32xf32>
    %21 = arith.addf %18, %20 : vector<8x32xf32>
    %cst_17 = arith.constant 0.000000e+00 : f32
    %22 = vector.broadcast %cst_17 : f32 to vector<8x32xf32>
    %23 = arith.maximumf %21, %22 : vector<8x32xf32>
    %24 = arith.truncf %23 : vector<8x32xf32> to vector<8x32xbf16>
    %c0_18 = arith.constant 0 : index
    %c0_19 = arith.constant 0 : index
    %25 = vector.load %arg8[%c0_18, %c0_19] : memref<32x2xbf16, #tpu.memory_space<vmem>>, vector<32x2xbf16>
    %cst_20 = arith.constant dense<0.000000e+00> : vector<8x2xf32>
    %26 = tpu.matmul %24, %25, %cst_20 {dimension_numbers = #tpu.dot_dimension_numbers<[1], [0], [0], [1], [0, 0, 1, 1], [], []>} : vector<8x32xbf16>, vector<32x2xbf16>, vector<8x2xf32> -> vector<8x2xf32>
    %c0_21 = arith.constant 0 : index
    %c0_22 = arith.constant 0 : index
    %27 = vector.load %arg9[%c0_21, %c0_22] : memref<1x2xf32, #tpu.memory_space<vmem>>, vector<1x2xf32>
    %28 = vector.broadcast %27 : vector<1x2xf32> to vector<8x2xf32>
    %29 = arith.addf %26, %28 : vector<8x2xf32>
    %30 = tpu.iota {dimensions = array<i32: 1>} : vector<8x2xi32>
    %c0_i32 = arith.constant 0 : i32
    %31 = vector.broadcast %c0_i32 : i32 to vector<8x2xi32>
    %32 = arith.cmpi eq, %30, %31 : vector<8x2xi32>
    %33 = arith.negf %29 : vector<8x2xf32>
    %34 = math.exp %33 : vector<8x2xf32>
    %cst_23 = arith.constant 1.000000e+00 : f32
    %35 = vector.broadcast %cst_23 : f32 to vector<8x2xf32>
    %36 = arith.addf %35, %34 : vector<8x2xf32>
    %37 = arith.divf %35, %36 : vector<8x2xf32>
    %38 = arith.select %32, %37, %29 : vector<8x2xi1>, vector<8x2xf32>
    %c0_24 = arith.constant 0 : index
    %c0_25 = arith.constant 0 : index
    %39 = vector.load %arg10[%c0_24, %c0_25] : memref<8x2xf32, #tpu.memory_space<vmem>>, vector<8x2xf32>
    tpu.vector_store %arg10[%c0_24, %c0_25], %38 {strides = array<i32>} : memref<8x2xf32, #tpu.memory_space<vmem>>, vector<8x2xf32>,
    return
  }
  func.func @transform_0(%arg0: i32) -> (i32, i32) {
    %c0_i32 = arith.constant 0 : i32
    %c0_i32_0 = arith.constant 0 : i32
    return %arg0, %c0_i32 : i32, i32
  }
  func.func @transform_1(%arg0: i32) -> (i32, i32) {
    %c0_i32 = arith.constant 0 : i32
    %c0_i32_0 = arith.constant 0 : i32
    %c0_i32_1 = arith.constant 0 : i32
    return %c0_i32, %c0_i32_0 : i32, i32
  }
  func.func @transform_2(%arg0: i32) -> (i32, i32) {
    %c0_i32 = arith.constant 0 : i32
    %c0_i32_0 = arith.constant 0 : i32
    %c0_i32_1 = arith.constant 0 : i32
    return %c0_i32, %c0_i32_0 : i32, i32
  }
  func.func @transform_3(%arg0: i32) -> (i32, i32) {
    %c0_i32 = arith.constant 0 : i32
    %c0_i32_0 = arith.constant 0 : i32
    %c0_i32_1 = arith.constant 0 : i32
    return %c0_i32, %c0_i32_0 : i32, i32
  }
  func.func @transform_4(%arg0: i32) -> (i32, i32) {
    %c0_i32 = arith.constant 0 : i32
    %c0_i32_0 = arith.constant 0 : i32
    %c0_i32_1 = arith.constant 0 : i32
    return %c0_i32, %c0_i32_0 : i32, i32
  }
  func.func @transform_5(%arg0: i32) -> (i32, i32) {
    %c0_i32 = arith.constant 0 : i32
    %c0_i32_0 = arith.constant 0 : i32
    %c0_i32_1 = arith.constant 0 : i32
    return %c0_i32, %c0_i32_0 : i32, i32
  }
  func.func @transform_6(%arg0: i32) -> (i32, i32) {
    %c0_i32 = arith.constant 0 : i32
    %c0_i32_0 = arith.constant 0 : i32
    %c0_i32_1 = arith.constant 0 : i32
    return %c0_i32, %c0_i32_0 : i32, i32
  }
  func.func @transform_7(%arg0: i32) -> (i32, i32) {
    %c0_i32 = arith.constant 0 : i32
    %c0_i32_0 = arith.constant 0 : i32
    %c0_i32_1 = arith.constant 0 : i32
    return %c0_i32, %c0_i32_0 : i32, i32
  }
  func.func @transform_8(%arg0: i32) -> (i32, i32) {
    %c0_i32 = arith.constant 0 : i32
    %c0_i32_0 = arith.constant 0 : i32
    %c0_i32_1 = arith.constant 0 : i32
    return %c0_i32, %c0_i32_0 : i32, i32
  }
  func.func @transform_9(%arg0: i32) -> (i32, i32) {
    %c0_i32 = arith.constant 0 : i32
    %c0_i32_0 = arith.constant 0 : i32
    return %arg0, %c0_i32 : i32, i32
  }
}

</mosaic_0001>

<llo_original>
// kernel: tpu_custom_call.1
$region0: #{tpu_custom_call.1}
  #allocation0 [shape = 'u32[]', space=smem, size = 0x4, offset = 0x4, fixed_abs, tag = 'smem constant byte address 0x4 - core index']
  #allocation1 [shape = 'u32[144,128]{1,0:T(1,128)}', space=vmem, size = 0x12000, scoped, tag = 'internal scratch']
  %s0 = inlined_call_operand.vmem [shape: bf16[8,32], index: 0, kind: input, shape index: {}]
  %s1 = inlined_call_operand.vmem [shape: bf16[32,64], index: 1, kind: input, shape index: {}]
  %s2 = inlined_call_operand.vmem [shape: f32[1,64], index: 2, kind: input, shape index: {}]
  %s3 = inlined_call_operand.vmem [shape: bf16[64,32], index: 3, kind: input, shape index: {}]
  %s4 = inlined_call_operand.vmem [shape: f32[1,32], index: 4, kind: input, shape index: {}]
  %s5 = inlined_call_operand.vmem [shape: bf16[32,32], index: 5, kind: input, shape index: {}]
  %s6 = inlined_call_operand.vmem [shape: f32[1,32], index: 6, kind: input, shape index: {}]
  %s7 = inlined_call_operand.vmem [shape: bf16[32,2], index: 7, kind: input, shape index: {}]
  %s8 = inlined_call_operand.vmem [shape: f32[1,2], index: 8, kind: input, shape index: {}]
  %s9 = inlined_call_operand.vmem [shape: f32[8,2], index: 9, kind: output, shape index: {}]
  %s10 = sld [smem:[#allocation0]]
  $region46: #{tpu_custom_call.1} parent=0
    _
  %s12 = ssub.s32 1, %s10
  %s13 = scalar_select 0, %s12, %s10
  // Predicated region
  $region2: #{tpu_custom_call.1} parent=0 // pred_check
    _
  $region3: #{tpu_custom_call.1} parent=0 // pred_check_branch
    %15 = sbr.rel (0) target = $region5
  $region4: #{tpu_custom_call.1} parent=0 // pred_region
    _
  $region5: #{tpu_custom_call.1} parent=0 // pred_fallthru
    _
  // Predicated region
  $region6: #{tpu_custom_call.1} parent=0 // pred_check
    _
  $region7: #{tpu_custom_call.1} parent=0 // pred_check_branch
    %17 = sbr.rel (0) target = $region9
  $region8: #{tpu_custom_call.1} parent=0 // pred_region
    _
  $region9: #{tpu_custom_call.1} parent=0 // pred_fallthru
    _
  // Predicated region
  $region10: #{tpu_custom_call.1} parent=0 // pred_check
    _
  $region11: #{tpu_custom_call.1} parent=0 // pred_check_branch
    %19 = sbr.rel (0) target = $region13
  $region12: #{tpu_custom_call.1} parent=0 // pred_region
    _
  $region13: #{tpu_custom_call.1} parent=0 // pred_fallthru
    _
  // Predicated region
  $region14: #{tpu_custom_call.1} parent=0 // pred_check
    _
  $region15: #{tpu_custom_call.1} parent=0 // pred_check_branch
    %21 = sbr.rel (0) target = $region17
  $region16: #{tpu_custom_call.1} parent=0 // pred_region
    _
  $region17: #{tpu_custom_call.1} parent=0 // pred_fallthru
    _
  // Predicated region
  $region18: #{tpu_custom_call.1} parent=0 // pred_check
    _
  $region19: #{tpu_custom_call.1} parent=0 // pred_check_branch
    %23 = sbr.rel (0) target = $region21
  $region20: #{tpu_custom_call.1} parent=0 // pred_region
    _
  $region21: #{tpu_custom_call.1} parent=0 // pred_fallthru
    _
  // Predicated region
  $region22: #{tpu_custom_call.1} parent=0 // pred_check
    _
  $region23: #{tpu_custom_call.1} parent=0 // pred_check_branch
    %25 = sbr.rel (0) target = $region25
  $region24: #{tpu_custom_call.1} parent=0 // pred_region
    _
  $region25: #{tpu_custom_call.1} parent=0 // pred_fallthru
    _
  // Predicated region
  $region26: #{tpu_custom_call.1} parent=0 // pred_check
    _
  $region27: #{tpu_custom_call.1} parent=0 // pred_check_branch
    %27 = sbr.rel (0) target = $region29
  $region28: #{tpu_custom_call.1} parent=0 // pred_region
    _
  $region29: #{tpu_custom_call.1} parent=0 // pred_fallthru
    _
  // Predicated region
  $region30: #{tpu_custom_call.1} parent=0 // pred_check
    _
  $region31: #{tpu_custom_call.1} parent=0 // pred_check_branch
    %29 = sbr.rel (0) target = $region33
  $region32: #{tpu_custom_call.1} parent=0 // pred_region
    _
  $region33: #{tpu_custom_call.1} parent=0 // pred_fallthru
    _
  // Predicated region
  $region34: #{tpu_custom_call.1} parent=0 // pred_check
    _
  $region35: #{tpu_custom_call.1} parent=0 // pred_check_branch
    %31 = sbr.rel (0) target = $region37
  $region36: #{tpu_custom_call.1} parent=0 // pred_region
    _
  $region37: #{tpu_custom_call.1} parent=0 // pred_fallthru
    _
  %v33 = vld [vmem:[%s0] sm:$0xf]
  %v34 = vld [vmem:[%s1] sm:$0xf]
  %v35 = vld [vmem:[%s1 + $0x4] sm:$0xf]
  %v36 = vld [vmem:[%s1 + $0x8] sm:$0xf]
  %v37 = vld [vmem:[%s1 + $0xc] sm:$0xf]
  %v38 = vld [vmem:[%s2] sm:$0x1]
  %v40 = vlaneseq
  %v41 = vshrl.u32 %v40, 7
  %v42 = vsub.s32 0, %v41
  %v43 = vrot.slane %v38, %v42
  %v49 = vunpack.c.l.b16 %v34
  %v50 = vunpack.c.l.b16 %v35
  %v51 = vunpack.c.l.b16 %v36
  %v52 = vunpack.c.l.b16 %v37
  %v53 = vpack.c.b16 %v50, %v49
  %v54 = vpack.c.b16 %v52, %v51
  %vm57 = vcmask 261120
  %v59 = vsel %vm57, %v33, 0
  %61 = vmatprep.subr.bf16.mxu0 0
  %62 = vmatpush1.bf16.msra.mxu0 0
  %63 = vmatprep.subr.bf16.mxu0 0
  %64 = vmatpush1.bf16.msra.mxu0 0
  %65 = vmatprep.subr.bf16.mxu0 0
  %66 = vmatpush1.bf16.msra.mxu0 0
  %67 = vmatprep.subr.bf16.mxu0 0
  %68 = vmatpush1.bf16.msra.mxu0 0
  %69 = vmatprep.subr.bf16.mxu0 0
  %70 = vmatpush1.bf16.msra.mxu0 0
  %71 = vmatprep.subr.bf16.mxu0 0
  %72 = vmatpush1.bf16.msra.mxu0 0
  %73 = vmatprep.subr.bf16.mxu0 0
  %74 = vmatpush1.bf16.msra.mxu0 %v54
  %75 = vmatprep.subr.bf16.mxu0 0
  %76 = vmatpush1.bf16.msra.mxu0 %v53
  %77 = vmatprep.subr.bf16.mxu0 0
  %78 = vmatpush2.bf16.msra.mxu0 0
  %79 = vmatprep.subr.bf16.mxu0 0
  %80 = vmatpush2.bf16.msra.mxu0 0
  %81 = vmatprep.subr.bf16.mxu0 0
  %82 = vmatpush2.bf16.msra.mxu0 0
  %83 = vmatprep.subr.bf16.mxu0 0
  %84 = vmatpush2.bf16.msra.mxu0 0
  %85 = vmatprep.subr.bf16.mxu0 0
  %86 = vmatpush2.bf16.msra.mxu0 0
  %87 = vmatprep.subr.bf16.mxu0 0
  %88 = vmatpush2.bf16.msra.mxu0 0
  %89 = vmatprep.subr.bf16.mxu0 0
  %90 = vmatpush2.bf16.msra.mxu0 0
  %91 = vmatprep.subr.bf16.mxu0 0
  %92 = vmatpush2.bf16.msra.mxu0 0
  %93 = vmatprep.mubr.bf16.mxu0 0
  %94 = vmatmul.mubr.bf16.gmra.mxu0 %v59
  %v95 = vpop.f32.mrf.mxu0
  %v96 = vadd.f32 %v43, %v95
  %v97 = vpop.f32.mrf.mxu0
  %v98 = vpop.f32.mrf.mxu0
  %v99 = vpop.f32.mrf.mxu0
  %100 = vdwg.mxu0
  %v101 = vmax.f32 %v96, 0.0
  %v102 = vpack.c.bf16 %v101, %v101
  %v103 = vld [vmem:[%s3] sm:$0xf]
  %v104 = vld [vmem:[%s3 + $0x4] sm:$0xf]
  %v105 = vld [vmem:[%s3 + $0x8] sm:$0xf]
  %v106 = vld [vmem:[%s3 + $0xc] sm:$0xf]
  %v107 = vld [vmem:[%s3 + $0x10] sm:$0xf]
  %v108 = vld [vmem:[%s3 + $0x14] sm:$0xf]
  %v109 = vld [vmem:[%s3 + $0x18] sm:$0xf]
  %v110 = vld [vmem:[%s3 + $0x1c] sm:$0xf]
  %v111 = vld [vmem:[%s4] sm:$0x1]
  %v113 = vlaneseq
  %v114 = vshrl.u32 %v113, 7
  %v115 = vsub.s32 0, %v114
  %v116 = vrot.slane %v111, %v115
  %v126 = vunpack.c.l.b16 %v103
  %v127 = vunpack.c.l.b16 %v104
  %v128 = vunpack.c.l.b16 %v105
  %v129 = vunpack.c.l.b16 %v106
  %v130 = vunpack.c.l.b16 %v107
  %v131 = vunpack.c.l.b16 %v108
  %v132 = vunpack.c.l.b16 %v109
  %v133 = vunpack.c.l.b16 %v110
  %v134 = vpack.c.b16 %v127, %v126
  %v135 = vpack.c.b16 %v129, %v128
  %v136 = vpack.c.b16 %v131, %v130
  %v137 = vpack.c.b16 %v133, %v132
  %vm142 = vcmask 523264
  %v144 = vsel %vm142, %v102, 0
  %146 = vmatprep.subr.bf16.mxu0 0
  %147 = vmatpush1.bf16.msra.mxu0 0
  %148 = vmatprep.subr.bf16.mxu0 0
  %149 = vmatpush1.bf16.msra.mxu0 0
  %150 = vmatprep.subr.bf16.mxu0 0
  %151 = vmatpush1.bf16.msra.mxu0 0
  %152 = vmatprep.subr.bf16.mxu0 0
  %153 = vmatpush1.bf16.msra.mxu0 0
  %154 = vmatprep.subr.bf16.mxu0 0
  %155 = vmatpush1.bf16.msra.mxu0 %v137
  %156 = vmatprep.subr.bf16.mxu0 0
  %157 = vmatpush1.bf16.msra.mxu0 %v136
  %158 = vmatprep.subr.bf16.mxu0 0
  %159 = vmatpush1.bf16.msra.mxu0 %v135
  %160 = vmatprep.subr.bf16.mxu0 0
  %161 = vmatpush1.bf16.msra.mxu0 %v134
  %162 = vmatprep.subr.bf16.mxu0 0
  %163 = vmatpush2.bf16.msra.mxu0 0
  %164 = vmatprep.subr.bf16.mxu0 0
  %165 = vmatpush2.bf16.msra.mxu0 0
  %166 = vmatprep.subr.bf16.mxu0 0
  %167 = vmatpush2.bf16.msra.mxu0 0
  %168 = vmatprep.subr.bf16.mxu0 0
  %169 = vmatpush2.bf16.msra.mxu0 0
  %170 = vmatprep.subr.bf16.mxu0 0
  %171 = vmatpush2.bf16.msra.mxu0 0
  %172 = vmatprep.subr.bf16.mxu0 0
  %173 = vmatpush2.bf16.msra.mxu0 0
  %174 = vmatprep.subr.bf16.mxu0 0
  %175 = vmatpush2.bf16.msra.mxu0 0
  %176 = vmatprep.subr.bf16.mxu0 0
  %177 = vmatpush2.bf16.msra.mxu0 0
  %178 = vmatprep.mubr.bf16.mxu0 0
  %179 = vmatmul.mubr.bf16.gmra.mxu0 %v144
  %v180 = vpop.f32.mrf.mxu0
  %v181 = vadd.f32 %v116, %v180
  %v182 = vpop.f32.mrf.mxu0
  %v183 = vpop.f32.mrf.mxu0
  %v184 = vpop.f32.mrf.mxu0
  %185 = vdwg.mxu0
  %v186 = vmax.f32 %v181, 0.0
  %v187 = vpack.c.bf16 %v186, %v186
  %v188 = vld [vmem:[%s5] sm:$0xf]
  %v189 = vld [vmem:[%s5 + $0x4] sm:$0xf]
  %v190 = vld [vmem:[%s5 + $0x8] sm:$0xf]
  %v191 = vld [vmem:[%s5 + $0xc] sm:$0xf]
  %v192 = vld [vmem:[%s6] sm:$0x1]
  %v194 = vlaneseq
  %v195 = vshrl.u32 %v194, 7
  %v196 = vsub.s32 0, %v195
  %v197 = vrot.slane %v192, %v196
  %v203 = vunpack.c.l.b16 %v188
  %v204 = vunpack.c.l.b16 %v189
  %v205 = vunpack.c.l.b16 %v190
  %v206 = vunpack.c.l.b16 %v191
  %v207 = vpack.c.b16 %v204, %v203
  %v208 = vpack.c.b16 %v206, %v205
  %v212 = vsel %vm57, %v187, 0
  %214 = vmatprep.subr.bf16.mxu0 0
  %215 = vmatpush1.bf16.msra.mxu0 0
  %216 = vmatprep.subr.bf16.mxu0 0
  %217 = vmatpush1.bf16.msra.mxu0 0
  %218 = vmatprep.subr.bf16.mxu0 0
  %219 = vmatpush1.bf16.msra.mxu0 0
  %220 = vmatprep.subr.bf16.mxu0 0
  %221 = vmatpush1.bf16.msra.mxu0 0
  %222 = vmatprep.subr.bf16.mxu0 0
  %223 = vmatpush1.bf16.msra.mxu0 0
  %224 = vmatprep.subr.bf16.mxu0 0
  %225 = vmatpush1.bf16.msra.mxu0 0
  %226 = vmatprep.subr.bf16.mxu0 0
  %227 = vmatpush1.bf16.msra.mxu0 %v208
  %228 = vmatprep.subr.bf16.mxu0 0
  %229 = vmatpush1.bf16.msra.mxu0 %v207
  %230 = vmatprep.subr.bf16.mxu0 0
  %231 = vmatpush2.bf16.msra.mxu0 0
  %232 = vmatprep.subr.bf16.mxu0 0
  %233 = vmatpush2.bf16.msra.mxu0 0
  %234 = vmatprep.subr.bf16.mxu0 0
  %235 = vmatpush2.bf16.msra.mxu0 0
  %236 = vmatprep.subr.bf16.mxu0 0
  %237 = vmatpush2.bf16.msra.mxu0 0
  %238 = vmatprep.subr.bf16.mxu0 0
  %239 = vmatpush2.bf16.msra.mxu0 0
  %240 = vmatprep.subr.bf16.mxu0 0
  %241 = vmatpush2.bf16.msra.mxu0 0
  %242 = vmatprep.subr.bf16.mxu0 0
  %243 = vmatpush2.bf16.msra.mxu0 0
  %244 = vmatprep.subr.bf16.mxu0 0
  %245 = vmatpush2.bf16.msra.mxu0 0
  %246 = vmatprep.mubr.bf16.mxu0 0
  %247 = vmatmul.mubr.bf16.gmra.mxu0 %v212
  %v248 = vpop.f32.mrf.mxu0
  %v249 = vadd.f32 %v197, %v248
  %v250 = vpop.f32.mrf.mxu0
  %v251 = vpop.f32.mrf.mxu0
  %v252 = vpop.f32.mrf.mxu0
  %253 = vdwg.mxu0
  %v254 = vmax.f32 %v249, 0.0
  %v255 = vpack.c.bf16 %v254, %v254
  %v256 = vld [vmem:[%s7] sm:$0xf]
  %v257 = vld [vmem:[%s7 + $0x4] sm:$0xf]
  %v258 = vld [vmem:[%s7 + $0x8] sm:$0xf]
  %v259 = vld [vmem:[%s7 + $0xc] sm:$0xf]
  %v260 = vld [vmem:[%s8] sm:$0x1]
  %v262 = vlaneseq
  %v263 = vshrl.u32 %v262, 7
  %v264 = vsub.s32 0, %v263
  %v265 = vrot.slane %v260, %v264
  %v271 = vunpack.c.l.b16 %v256
  %v272 = vunpack.c.l.b16 %v257
  %v273 = vunpack.c.l.b16 %v258
  %v274 = vunpack.c.l.b16 %v259
  %v275 = vpack.c.b16 %v272, %v271
  %v276 = vpack.c.b16 %v274, %v273
  %v280 = vsel %vm57, %v255, 0
  %282 = vmatprep.subr.bf16.mxu0 0
  %283 = vmatpush1.bf16.msra.mxu0 0
  %284 = vmatprep.subr.bf16.mxu0 0
  %285 = vmatpush1.bf16.msra.mxu0 0
  %286 = vmatprep.subr.bf16.mxu0 0
  %287 = vmatpush1.bf16.msra.mxu0 0
  %288 = vmatprep.subr.bf16.mxu0 0
  %289 = vmatpush1.bf16.msra.mxu0 0
  %290 = vmatprep.subr.bf16.mxu0 0
  %291 = vmatpush1.bf16.msra.mxu0 0
  %292 = vmatprep.subr.bf16.mxu0 0
  %293 = vmatpush1.bf16.msra.mxu0 0
  %294 = vmatprep.subr.bf16.mxu0 0
  %295 = vmatpush1.bf16.msra.mxu0 %v276
  %296 = vmatprep.subr.bf16.mxu0 0
  %297 = vmatpush1.bf16.msra.mxu0 %v275
  %298 = vmatprep.subr.bf16.mxu0 0
  %299 = vmatpush2.bf16.msra.mxu0 0
  %300 = vmatprep.subr.bf16.mxu0 0
  %301 = vmatpush2.bf16.msra.mxu0 0
  %302 = vmatprep.subr.bf16.mxu0 0
  %303 = vmatpush2.bf16.msra.mxu0 0
  %304 = vmatprep.subr.bf16.mxu0 0
  %305 = vmatpush2.bf16.msra.mxu0 0
  %306 = vmatprep.subr.bf16.mxu0 0
  %307 = vmatpush2.bf16.msra.mxu0 0
  %308 = vmatprep.subr.bf16.mxu0 0
  %309 = vmatpush2.bf16.msra.mxu0 0
  %310 = vmatprep.subr.bf16.mxu0 0
  %311 = vmatpush2.bf16.msra.mxu0 0
  %312 = vmatprep.subr.bf16.mxu0 0
  %313 = vmatpush2.bf16.msra.mxu0 0
  %314 = vmatprep.mubr.bf16.mxu0 0
  %315 = vmatmul.mubr.bf16.gmra.mxu0 %v280
  %v316 = vpop.f32.mrf.mxu0
  %v317 = vadd.f32 %v265, %v316
  %v318 = vpop.f32.mrf.mxu0
  %v319 = vpop.f32.mrf.mxu0
  %v320 = vpop.f32.mrf.mxu0
  %321 = vdwg.mxu0
  %v322 = vlaneseq
  %v323 = vand.u32 %v322, 127
  %vm324 = vcmp.eq.s32.totalorder %v323, 0
  %v325 = vxor.u32 %v317, 2147483648
  %v326 = vmul.f32 %v325, 1.442695
  %v327 = vpow.pop %v326
  %v328 = vadd.f32 %v327, 1.0
  %v329 = vrcp.pop %v328
  %v330 = vmul.f32 1.0, %v329
  %v331 = vsel %vm324, %v330, %v317
  %vm332 = vcmask 15360
  %333 = vst.msk [vmem:[%s9] sm:$0xff] %vm332, %v331
  // Predicated region
  $region38: #{tpu_custom_call.1} parent=0 // pred_check
    _
  $region39: #{tpu_custom_call.1} parent=0 // pred_check_branch
    %335 = sbr.rel (0) target = $region41
  $region40: #{tpu_custom_call.1} parent=0 // pred_region
    _
  $region41: #{tpu_custom_call.1} parent=0 // pred_fallthru
    _
  // Predicated region
  $region42: #{tpu_custom_call.1} parent=0 // pred_check
    _
  $region43: #{tpu_custom_call.1} parent=0 // pred_check_branch
    %337 = sbr.rel (0) target = $region45
  $region44: #{tpu_custom_call.1} parent=0 // pred_region
    _
  $region45: #{tpu_custom_call.1} parent=0 // pred_fallthru
    _

</llo_original>
